<compile_context>
chip_gen: v5e
topology: v5e:2x2
jax: 0.10.0
libtpu: 0.0.40
codegen_flags: <defaults>
</compile_context>

<pallas_src>
import jax
import jax.numpy as jnp
from jax.experimental import pallas as pl
from jax.experimental.pallas import tpu as pltpu
from functools import reduce
from operator import mul


_LANE = 128  # vreg lane count (last dim)


def _copy_kernel(x_ref, o_ref):
    # Identity copy of one lane-dense tile through VMEM.
    o_ref[...] = x_ref[...]


def _device_kind():
    try:
        return jax.devices()[0].device_kind.lower()
    except Exception:
        return ""


def _gen_config():
    """Per-generation (max_tile_bytes, vmem_limit_bytes, min_grid_blocks)."""
    kind = _device_kind()
    if "v5 lite" in kind or "v5e" in kind or "v5litepod" in kind:
        # 4 bufs x 3 MiB = 12 MiB, leaves headroom under the 16 MiB scoped default.
        return 3 * 1024 * 1024, None, 1
    if "v6" in kind:
        # 128 MiB physical: bigger tiles, fewer grid steps; raise scoped limit.
        return 8 * 1024 * 1024, 48 * 1024 * 1024, 1
    if "v7" in kind:
        # 64 MiB physical / 32 MiB scoped; keep 4 MiB tiles but make sure the
        # "parallel" grid axis has >= 2 blocks to feed both TensorCores.
        return 4 * 1024 * 1024, 32 * 1024 * 1024, 2
    return 4 * 1024 * 1024, None, 1


def _sublane(itemsize):
    # 8 for f32, 16 for bf16, 32 for int8/fp8 — keeps packed vregs unmasked.
    return max(8, 32 // max(1, itemsize))


def _choose_tiling(total_elems, itemsize, max_tile_bytes, min_blocks):
    """Pick a lane-dense (R, W) flattened view and row tile TR.

    Returns (R, W, TR) or None if no lane-dense view exists.
    """
    if total_elems % _LANE != 0:
        return None
    sublane = _sublane(itemsize)

    # Prefer the widest lane-dense W whose row count is a sublane multiple.
    best = None
    for w in (4096, 2048, 1024, 512, 256, 128):
        if total_elems % w:
            continue
        r = total_elems // w
        if r % sublane == 0:
            best = (r, w)
            break
        if best is None:
            best = (r, w)
    if best is None:
        return None
    r, w = best

    # Largest sublane-aligned row tile that fits the per-block VMEM budget.
    max_rows = max(1, max_tile_bytes // (w * itemsize))
    tr = (max_rows // sublane) * sublane
    if tr == 0:
        tr = min(sublane, r)
    tr = min(tr, r)

    # On v7x make sure there are >= min_blocks grid steps so the "parallel"
    # axis actually shards across both TensorCores.
    while min_blocks > 1 and pl.cdiv(r, tr) < min_blocks and tr > sublane:
        half = (tr // 2 // sublane) * sublane
        if half < sublane:
            break
        tr = half

    return r, w, tr


def _pallas_tiled_copy(x2d, tr, vmem_limit):
    r, w = x2d.shape
    itemsize = jnp.dtype(x2d.dtype).itemsize
    return pl.pallas_call(
        _copy_kernel,
        out_shape=jax.ShapeDtypeStruct((r, w), x2d.dtype),
        grid=(pl.cdiv(r, tr),),
        in_specs=[pl.BlockSpec((tr, w), lambda i: (i, 0))],
        out_specs=pl.BlockSpec((tr, w), lambda i: (i, 0)),
        cost_estimate=pl.CostEstimate(
            flops=0, transcendentals=0, bytes_accessed=2 * r * w * itemsize),
        compiler_params=pltpu.CompilerParams(
            dimension_semantics=("parallel",),
            vmem_limit_bytes=vmem_limit),
    )(x2d)


def _pallas_full_copy(x2d):
    # Single-block copy: block shape == full array dims is always legal.
    r, w = x2d.shape
    itemsize = jnp.dtype(x2d.dtype).itemsize
    return pl.pallas_call(
        _copy_kernel,
        out_shape=jax.ShapeDtypeStruct((r, w), x2d.dtype),
        grid=(1,),
        in_specs=[pl.BlockSpec((r, w), lambda i: (0, 0))],
        out_specs=pl.BlockSpec((r, w), lambda i: (0, 0)),
        cost_estimate=pl.CostEstimate(
            flops=0, transcendentals=0, bytes_accessed=2 * r * w * itemsize),
    )(x2d)


class ReshapeTensorPallas:
    """JAX/Pallas equivalent of models.layers.reshape_tensor."""

    def __init__(self, *args, materialize=False):
        self.output_dim = list(args)
        # When False (default), the reshape is metadata-only (== torch .view).
        # When True, the result is a freshly materialized contiguous slab
        # produced by a tiled Pallas identity copy.
        self.materialize = materialize

    def __call__(self, x, batch_size):
        n = reduce(mul, self.output_dim, 1)
        out_shape = [batch_size] + self.output_dim

        if not self.materialize:
            # torch .view is free; so is jnp.reshape. No kernel, no HBM traffic.
            return jnp.reshape(x, out_shape)

        total = batch_size * n
        itemsize = jnp.dtype(x.dtype).itemsize
        max_tile_bytes, vmem_limit, min_blocks = _gen_config()

        tiling = _choose_tiling(total, itemsize, max_tile_bytes, min_blocks)
        if tiling is not None:
            r, w, tr = tiling
            x2d = jnp.reshape(x, (r, w))      # row-major, same element order
            out2d = _pallas_tiled_copy(x2d, tr, vmem_limit)
            return jnp.reshape(out2d, out_shape)

        # No lane-dense tiling (element count not a multiple of 128): do a
        # single-block full-array copy if it comfortably fits VMEM.
        if total * itemsize <= max_tile_bytes:
            x2d = jnp.reshape(x, (1, total))
            out2d = _pallas_full_copy(x2d)
            return jnp.reshape(out2d, out_shape)

        # TODO(synk): huge slabs with element count not divisible by 128 are
        # returned as a metadata-only reshape (no physical copy).
        return jnp.reshape(x, out_shape)


if __name__ == "__main__":
    key = jax.random.PRNGKey(0)

    batch_size = 2
    C, H, W = 4, 16, 16

    # Input arrives flattened per-sample (e.g. out of a linear layer) and the
    # module reshapes it to [batch, C, H, W].
    x = jax.random.normal(key, (batch_size, C * H * W), dtype=jnp.float32)
    y_ref = jnp.reshape(x, (batch_size, C, H, W))

    # 1) Default (recommended) path: metadata-only reshape, no kernel.
    module_meta = ReshapeTensorPallas(C, H, W)
    y_meta = jax.block_until_ready(module_meta(x, batch_size))

    # 2) Explicit-copy path (f32): exercises the tiled Pallas kernel.
    module_copy = ReshapeTensorPallas(C, H, W, materialize=True)
    y_copy = jax.block_until_ready(module_copy(x, batch_size))

    for y in (y_meta, y_copy):
        assert y.shape == (batch_size, C, H, W), y.shape
        assert y.dtype == x.dtype
        assert bool(jnp.array_equal(y, y_ref))

    # 3) Explicit-copy path (bf16): exercises the packed-sublane (16) tiling.
    x_bf16 = x.astype(jnp.bfloat16)
    y_bf16 = jax.block_until_ready(module_copy(x_bf16, batch_size))
    assert y_bf16.shape == (batch_size, C, H, W)
    assert bool(jnp.array_equal(y_bf16, jnp.reshape(x_bf16, (batch_size, C, H, W))))

    # 4) Explicit-copy path with an element count NOT divisible by 128:
    #    exercises the single-block full-array fallback (no silent no-op).
    module_odd = ReshapeTensorPallas(3, 5, 7, materialize=True)
    x_odd = jax.random.normal(jax.random.PRNGKey(1), (batch_size, 3 * 5 * 7),
                              dtype=jnp.float32)
    y_odd = jax.block_until_ready(module_odd(x_odd, batch_size))
    assert y_odd.shape == (batch_size, 3, 5, 7)
    assert bool(jnp.array_equal(y_odd, jnp.reshape(x_odd, (batch_size, 3, 5, 7))))

    print("KERNEL_OK")
</pallas_src>

<mosaic_0001>
module attributes {stable_mosaic.version = 11 : i64} {
  func.func @_copy_kernel(%arg0: i32, %arg1: memref<8x256xf32, #tpu.memory_space<vmem>>, %arg2: memref<8x256xf32, #tpu.memory_space<vmem>>) attributes {dimension_semantics = [#tpu.dimension_semantics<parallel>], iteration_bounds = array<i64: 1>, scalar_prefetch = 0 : i64, scratch_operands = 0 : i64, tpu.core_type = #tpu.core_type<tc>, window_params = [{transform_indices = @transform_0, window_bounds = array<i64: 8, 256>}, {transform_indices = @transform_1, window_bounds = array<i64: 8, 256>}]} {
    %c0 = arith.constant 0 : index
    %c0_0 = arith.constant 0 : index
    %0 = vector.load %arg1[%c0, %c0_0] : memref<8x256xf32, #tpu.memory_space<vmem>>, vector<8x256xf32>
    %c0_1 = arith.constant 0 : index
    %c0_2 = arith.constant 0 : index
    %1 = vector.load %arg2[%c0_1, %c0_2] : memref<8x256xf32, #tpu.memory_space<vmem>>, vector<8x256xf32>
    tpu.vector_store %arg2[%c0_1, %c0_2], %0 {strides = array<i32>} : memref<8x256xf32, #tpu.memory_space<vmem>>, vector<8x256xf32>,
    return
  }
  func.func @transform_0(%arg0: i32) -> (i32, i32) {
    %c0_i32 = arith.constant 0 : i32
    %c0_i32_0 = arith.constant 0 : i32
    return %arg0, %c0_i32 : i32, i32
  }
  func.func @transform_1(%arg0: i32) -> (i32, i32) {
    %c0_i32 = arith.constant 0 : i32
    %c0_i32_0 = arith.constant 0 : i32
    return %arg0, %c0_i32 : i32, i32
  }
}

</mosaic_0001>

<llo_original>
// kernel: tpu_custom_call.1
$region0: #{tpu_custom_call.1}
  #allocation0 [shape = 'u32[]', space=smem, size = 0x4, offset = 0x4, fixed_abs, tag = 'smem constant byte address 0x4 - core index']
  #allocation1 [shape = 'u32[72,128]{1,0:T(1,128)}', space=vmem, size = 0x9000, scoped, tag = 'internal scratch']
  %s0 = inlined_call_operand.hbm [shape: f32[8,256], index: 0, kind: input, shape index: {}]
  %s1 = inlined_call_operand.hbm [shape: f32[8,256], index: 1, kind: output, shape index: {}]
  %s2 = sld [smem:[#allocation0]]
  $region18: #{tpu_custom_call.1} parent=0
    _
  %s4 = ssub.s32 1, %s2
  %s5 = scalar_select 0, %s4, %s2
  $region1: #{tpu_custom_call.1} parent=0
    #allocation2 [shape = 'u8[8192]{0}', space=vmem, size = 0x2000, scoped, tag = 'input window, operand 0, single buffered']
    #allocation3 [shape = 's32[1]{0}', space=sflag, size = 0x4, scoped, tag = 'scoped memory for tpu_custom_call.1']
    #allocation4 [shape = 's32[1]{0}', space=sflag, size = 0x4, scoped, tag = 'scoped memory for tpu_custom_call.1']
    #allocation5 [shape = 'u8[8192]{0}', space=vmem, size = 0x2000, scoped, tag = 'output window, operand 0, single buffered']
    %6 = vsyncpa [#allocation3], 0
    %7 = vsyncpa [#allocation4], 0
    // Predicated region
    $region2: #{tpu_custom_call.1} parent=1 // pred_check
      _
    $region3: #{tpu_custom_call.1} parent=1 // pred_check_branch
      %9 = sbr.rel (0) target = $region5
    $region4: #{tpu_custom_call.1} parent=1 // pred_region
      %11 = vsyncadd [#allocation3], 0
      %s13 = sshll.u32 %s0, 4
      %s14 = int_to_ptr.hbm [resolvable:$true] %s13
      %s15 = sshll.u32 [#allocation2], 4
      %s16 = int_to_ptr.vmem [resolvable:$true] %s15
      %18 = dma.hbm_to_vmem [thread:$0]  %s14, 256, %s16, [#allocation3]
    $region5: #{tpu_custom_call.1} parent=1 // pred_fallthru
      _
    // Predicated region
    $region6: #{tpu_custom_call.1} parent=1 // pred_check
      _
    $region7: #{tpu_custom_call.1} parent=1 // pred_check_branch
      %20 = sbr.rel (0) target = $region9
    $region8: #{tpu_custom_call.1} parent=1 // pred_region
      %22 = dma.done [#allocation3], 256
    $region9: #{tpu_custom_call.1} parent=1 // pred_fallthru
      _
    %v23 = vld [vmem:[#allocation2] sm:$0xff]
    %v24 = vld [vmem:[#allocation2 + $0x8] sm:$0xff]
    %25 = vst [vmem:[#allocation5] sm:$0xff] %v23
    %26 = vst [vmem:[#allocation5 + $0x8] sm:$0xff] %v24
    // Predicated region
    $region10: #{tpu_custom_call.1} parent=1 // pred_check
      _
    $region11: #{tpu_custom_call.1} parent=1 // pred_check_branch
      %28 = sbr.rel (0) target = $region13
    $region12: #{tpu_custom_call.1} parent=1 // pred_region
      %30 = vsyncadd [#allocation4], 0
      %s32 = sshll.u32 [#allocation5], 4
      %s33 = int_to_ptr.vmem [resolvable:$true] %s32
      %s34 = sshll.u32 %s1, 4
      %s35 = int_to_ptr.hbm [resolvable:$true] %s34
      %37 = dma.vmem_to_hbm [thread:$0]  %s33, 256, %s35, [#allocation4]
    $region13: #{tpu_custom_call.1} parent=1 // pred_fallthru
      _
    // Predicated region
    $region14: #{tpu_custom_call.1} parent=1 // pred_check
      _
    $region15: #{tpu_custom_call.1} parent=1 // pred_check_branch
      %39 = sbr.rel (0) target = $region17
    $region16: #{tpu_custom_call.1} parent=1 // pred_region
      %41 = dma.done [#allocation4], 256
    $region17: #{tpu_custom_call.1} parent=1 // pred_fallthru
      _
    %42 = vsyncpa [#allocation3], 1
    %43 = vsyncpa [#allocation4], 1

</llo_original>
